<compile_context>
chip_gen: v7x
topology: tpu7x:2x2x1
jax: 0.10.0
libtpu: 0.0.40
codegen_flags: <defaults>
</compile_context>

<pallas_src>
import functools

import numpy as np
import jax
import jax.numpy as jnp
from jax.experimental import pallas as pl
from jax.experimental.pallas import tpu as pltpu


def _round_up(x, m):
    return (x + m - 1) // m * m


def _vmem_capacity_bytes():
    try:
        return int(pltpu.get_tpu_info().vmem_capacity_bytes)
    except Exception:
        return 64 * 1024 * 1024  # conservative: v7x per-core VMEM


def _vmem_estimate_bytes(tm, D, c_itemsize, out_itemsize):
    act_in = 2 * 3 * tm * D * 4           # double-buffered f32 input tiles (3 streams)
    act_out = 2 * tm * D * out_itemsize   # double-buffered output tile
    temps = (6 * 4 + 3 * c_itemsize) * tm * D  # in-kernel temporaries (Mosaic reuses buffers)
    return act_in + act_out + temps


# ----------------------------------------------------------------------------
# Kernel
# ----------------------------------------------------------------------------
def _fusion_kernel(x1_ref, x2_ref, x3_ref,
                   w1_ref, b1_ref, w2_ref, b2_ref, w3_ref, b3_ref,
                   wf_ref, bf_ref, o_ref, *, approx_recip):
    cdt = w1_ref.dtype
    # f32 -> compute-dtype cast happens here (VPU), not as a separate XLA op.
    y1 = jnp.dot(x1_ref[...].astype(cdt), w1_ref[...],
                 preferred_element_type=jnp.float32) + b1_ref[...]
    y2 = jnp.dot(x2_ref[...].astype(cdt), w2_ref[...],
                 preferred_element_type=jnp.float32) + b2_ref[...]
    y3 = jnp.dot(x3_ref[...].astype(cdt), w3_ref[...],
                 preferred_element_type=jnp.float32) + b3_ref[...]

    # Softmax over the 3 branches + attention-weighted sum, strictly f32 math
    # (v5e has no bf16 VPU/EUP; exp goes to the EUP slot either way).
    m = jnp.maximum(jnp.maximum(y1, y2), y3)
    e1 = jnp.exp(y1 - m)
    e2 = jnp.exp(y2 - m)
    e3 = jnp.exp(y3 - m)
    num = e1 * y1 + e2 * y2 + e3 * y3
    den = e1 + e2 + e3
    fused = num * pl.reciprocal(den, approx=approx_recip)

    out = jnp.dot(fused.astype(cdt), wf_ref[...],
                  preferred_element_type=jnp.float32) + bf_ref[...]
    o_ref[...] = out.astype(o_ref.dtype)


# ----------------------------------------------------------------------------
# One-time parameter packing (hoisted out of the hot path)
# ----------------------------------------------------------------------------
def prepare_fusion_params(params, *, compute_dtype=jnp.bfloat16):
    """Transpose the nn.Linear weights once; biases become (1, D) f32 rows."""
    D = params["w1"].shape[0]
    cdt = np.dtype(compute_dtype)
    prep = {"D": D, "compute_dtype": cdt}
    for k in ("1", "2", "3"):
        prep["w" + k] = jnp.asarray(params["w" + k]).T.astype(cdt)
        prep["b" + k] = jnp.asarray(params["b" + k]).reshape(1, D).astype(jnp.float32)
    prep["wf"] = jnp.asarray(params["wf"]).T.astype(cdt)
    prep["bf"] = jnp.asarray(params["bf"]).reshape(1, D).astype(jnp.float32)
    return prep


def _default_tile_rows(D):
    # Target ~2 MiB of f32 activation input (3 streams) per grid step.
    tm = (2 * 1024 * 1024) // max(1, 12 * D)
    tm = max(256, min(8192, tm))
    return (tm // 256) * 256


# ----------------------------------------------------------------------------
# Wrapper
# ----------------------------------------------------------------------------
def fusion_triple_feature(seq_hidden, pos_emb, feature_emb, prepared, *,
                          tm=None, vmem_limit_bytes=None):
    """seq_hidden / pos_emb / feature_emb: (B, L, D) f32.  Returns (B, L, D)."""
    B, L, D = seq_hidden.shape
    assert D == prepared["D"], "params were prepared for a different emb_dim"
    M = B * L
    out_dtype = seq_hidden.dtype
    cdt = prepared["compute_dtype"]
    c_itemsize = cdt.itemsize
    out_itemsize = np.dtype(out_dtype).itemsize
    approx_recip = c_itemsize < 4     # approx EUP reciprocal only on the bf16 path

    # ---- tile sizing against the per-generation VMEM budget -----------------
    vmem_budget = int(0.75 * _vmem_capacity_bytes())
    if vmem_limit_bytes is None:
        vmem_limit_bytes = vmem_budget

    param_bytes = 4 * D * D * c_itemsize + 4 * D * 4
    weight_bytes = 2 * param_bytes    # conservative: weights may be double-buffered

    tm_eff = _default_tile_rows(D) if tm is None else max(8, (int(tm) // 8) * 8)
    tm_eff = min(tm_eff, _round_up(M, 8))
    # >= 4 grid steps when M allows (>= 2 per v7x TensorCore so the BlockSpec
    # double-buffering has something to overlap).
    while tm_eff > 256 and pl.cdiv(M, tm_eff) < 4:
        tm_eff = max(256, (tm_eff // 2 // 8) * 8)
    # Shrink until activations + resident weights fit the VMEM budget.
    while tm_eff > 128 and (weight_bytes +
                            _vmem_estimate_bytes(tm_eff, D, c_itemsize, out_itemsize)
                            ) > vmem_budget:
        tm_eff = max(128, (tm_eff // 2 // 8) * 8)
    # TODO(synk): for very large D (>= ~2k) stream the branch / final weights
    # over a second innermost "arbitrary" grid axis (with an f32 accumulator)
    # instead of keeping them VMEM-resident; matters on v7x's 64 MiB VMEM.

    grid = (pl.cdiv(M, tm_eff),)

    # No wrapper-side repack: raw (M, D) f32 views; Pallas masks the partial
    # last row block, and the output is emitted directly at (M, D).
    x1 = seq_hidden.reshape(M, D)
    x2 = pos_emb.reshape(M, D)
    x3 = feature_emb.reshape(M, D)

    x_spec = pl.BlockSpec((tm_eff, D), lambda i: (i, 0))
    w_spec = pl.BlockSpec((D, D), lambda i: (0, 0))
    b_spec = pl.BlockSpec((1, D), lambda i: (0, 0))
    out_spec = pl.BlockSpec((tm_eff, D), lambda i: (i, 0))

    cost = pl.CostEstimate(
        flops=8 * M * D * D,                 # 4 matmuls, 2*M*D*D each
        transcendentals=3 * M * D,           # the three exps
        bytes_accessed=3 * M * D * 4 + M * D * out_itemsize + param_bytes,
    )

    out = pl.pallas_call(
        functools.partial(_fusion_kernel, approx_recip=approx_recip),
        out_shape=jax.ShapeDtypeStruct((M, D), out_dtype),
        grid_spec=pltpu.PrefetchScalarGridSpec(
            num_scalar_prefetch=0,
            grid=grid,
            in_specs=[x_spec, x_spec, x_spec,
                      w_spec, b_spec, w_spec, b_spec, w_spec, b_spec,
                      w_spec, b_spec],
            out_specs=out_spec,
        ),
        compiler_params=pltpu.CompilerParams(
            dimension_semantics=("parallel",),
            vmem_limit_bytes=int(vmem_limit_bytes)),
        cost_estimate=cost,
    )(x1, x2, x3,
      prepared["w1"], prepared["b1"],
      prepared["w2"], prepared["b2"],
      prepared["w3"], prepared["b3"],
      prepared["wf"], prepared["bf"])

    return out.reshape(B, L, D)   # no-op view: output already (M, D)


# ----------------------------------------------------------------------------
# Reference + test
# ----------------------------------------------------------------------------
def init_params(key, emb_dim):
    ks = jax.random.split(key, 8)
    bound = 1.0 / jnp.sqrt(emb_dim)

    def u(k, shape):
        return jax.random.uniform(k, shape, jnp.float32, -bound, bound)

    return {
        "w1": u(ks[0], (emb_dim, emb_dim)), "b1": u(ks[1], (emb_dim,)),
        "w2": u(ks[2], (emb_dim, emb_dim)), "b2": u(ks[3], (emb_dim,)),
        "w3": u(ks[4], (emb_dim, emb_dim)), "b3": u(ks[5], (emb_dim,)),
        "wf": u(ks[6], (emb_dim, emb_dim)), "bf": u(ks[7], (emb_dim,)),
    }


def reference(seq_hidden, pos_emb, feature_emb, params):
    def lin(x, w, b):
        return x @ w.T + b
    y1 = lin(seq_hidden, params["w1"], params["b1"])[:, None]   # (B,1,L,D)
    y2 = lin(pos_emb, params["w2"], params["b2"])[:, None]
    y3 = lin(feature_emb, params["w3"], params["b3"])[:, None]
    fusion = jnp.concatenate([y1, y2, y3], axis=1)              # (B,3,L,D)
    attn = jax.nn.softmax(fusion, axis=1)
    fused = jnp.sum(attn * fusion, axis=1)                      # (B,L,D)
    return fused @ params["wf"].T + params["bf"]


if __name__ == "__main__":
    key = jax.random.PRNGKey(0)

    def run_case(case_id, B, L, D, *, compute_dtype, atol, rtol):
        k_in, k_p = jax.random.split(jax.random.fold_in(key, case_id))
        k1, k2, k3 = jax.random.split(k_in, 3)
        seq_hidden = jax.random.normal(k1, (B, L, D), jnp.float32)
        pos_emb = jax.random.normal(k2, (B, L, D), jnp.float32)
        feature_emb = jax.random.normal(k3, (B, L, D), jnp.float32)
        params = init_params(k_p, D)

        prepared = prepare_fusion_params(params, compute_dtype=compute_dtype)
        out = fusion_triple_feature(seq_hidden, pos_emb, feature_emb, prepared)
        out = jax.block_until_ready(out)

        ref = reference(seq_hidden, pos_emb, feature_emb, params)
        assert out.shape == (B, L, D)
        err = float(jnp.max(jnp.abs(out - ref)))
        assert jnp.allclose(out, ref, atol=atol, rtol=rtol), (
            f"case {case_id}: max abs err {err}")

    # Small shapes consistent with the module (batch=2, seq=8, hidden=32), bf16 MXU.
    run_case(0, B=2, L=8, D=32, compute_dtype=jnp.bfloat16, atol=1e-1, rtol=1e-1)
    # Same case in f32 for a tight numerical check of the kernel math.
    run_case(1, B=2, L=8, D=32, compute_dtype=jnp.float32, atol=1e-4, rtol=1e-4)
    # Larger D and a row count that is not a multiple of the default tile.
    run_case(2, B=2, L=12, D=64, compute_dtype=jnp.bfloat16, atol=1e-1, rtol=1e-1)

    print("KERNEL_OK")
</pallas_src>

<mosaic_0001>
module attributes {stable_mosaic.version = 11 : i64} {
  func.func @_fusion_kernel(%arg0: i32, %arg1: memref<16x32xf32, #tpu.memory_space<vmem>>, %arg2: memref<16x32xf32, #tpu.memory_space<vmem>>, %arg3: memref<16x32xf32, #tpu.memory_space<vmem>>, %arg4: memref<32x32xbf16, #tpu.memory_space<vmem>>, %arg5: memref<1x32xf32, #tpu.memory_space<vmem>>, %arg6: memref<32x32xbf16, #tpu.memory_space<vmem>>, %arg7: memref<1x32xf32, #tpu.memory_space<vmem>>, %arg8: memref<32x32xbf16, #tpu.memory_space<vmem>>, %arg9: memref<1x32xf32, #tpu.memory_space<vmem>>, %arg10: memref<32x32xbf16, #tpu.memory_space<vmem>>, %arg11: memref<1x32xf32, #tpu.memory_space<vmem>>, %arg12: memref<16x32xf32, #tpu.memory_space<vmem>>) attributes {dimension_semantics = [#tpu.dimension_semantics<parallel>], iteration_bounds = array<i64: 1>, scalar_prefetch = 0 : i64, scratch_operands = 0 : i64, tpu.core_type = #tpu.core_type<tc>, window_params = [{transform_indices = @transform_0, window_bounds = array<i64: 16, 32>}, {transform_indices = @transform_1, window_bounds = array<i64: 16, 32>}, {transform_indices = @transform_2, window_bounds = array<i64: 16, 32>}, {pipeline_mode = #tpu.pipeline_mode<synchronous>, transform_indices = @transform_3, window_bounds = array<i64: 32, 32>}, {pipeline_mode = #tpu.pipeline_mode<synchronous>, transform_indices = @transform_4, window_bounds = array<i64: 1, 32>}, {pipeline_mode = #tpu.pipeline_mode<synchronous>, transform_indices = @transform_5, window_bounds = array<i64: 32, 32>}, {pipeline_mode = #tpu.pipeline_mode<synchronous>, transform_indices = @transform_6, window_bounds = array<i64: 1, 32>}, {pipeline_mode = #tpu.pipeline_mode<synchronous>, transform_indices = @transform_7, window_bounds = array<i64: 32, 32>}, {pipeline_mode = #tpu.pipeline_mode<synchronous>, transform_indices = @transform_8, window_bounds = array<i64: 1, 32>}, {pipeline_mode = #tpu.pipeline_mode<synchronous>, transform_indices = @transform_9, window_bounds = array<i64: 32, 32>}, {pipeline_mode = #tpu.pipeline_mode<synchronous>, transform_indices = @transform_10, window_bounds = array<i64: 1, 32>}, {transform_indices = @transform_11, window_bounds = array<i64: 16, 32>}]} {
    %c0 = arith.constant 0 : index
    %c0_0 = arith.constant 0 : index
    %0 = vector.load %arg1[%c0, %c0_0] : memref<16x32xf32, #tpu.memory_space<vmem>>, vector<16x32xf32>
    %1 = arith.truncf %0 : vector<16x32xf32> to vector<16x32xbf16>
    %c0_1 = arith.constant 0 : index
    %c0_2 = arith.constant 0 : index
    %2 = vector.load %arg4[%c0_1, %c0_2] : memref<32x32xbf16, #tpu.memory_space<vmem>>, vector<32x32xbf16>
    %cst = arith.constant dense<0.000000e+00> : vector<16x32xf32>
    %3 = tpu.matmul %1, %2, %cst {dimension_numbers = #tpu.dot_dimension_numbers<[1], [0], [0], [1], [0, 0, 1, 1], [], []>} : vector<16x32xbf16>, vector<32x32xbf16>, vector<16x32xf32> -> vector<16x32xf32>
    %c0_3 = arith.constant 0 : index
    %c0_4 = arith.constant 0 : index
    %4 = vector.load %arg5[%c0_3, %c0_4] : memref<1x32xf32, #tpu.memory_space<vmem>>, vector<1x32xf32>
    %5 = vector.broadcast %4 : vector<1x32xf32> to vector<16x32xf32>
    %6 = arith.addf %3, %5 : vector<16x32xf32>
    %c0_5 = arith.constant 0 : index
    %c0_6 = arith.constant 0 : index
    %7 = vector.load %arg2[%c0_5, %c0_6] : memref<16x32xf32, #tpu.memory_space<vmem>>, vector<16x32xf32>
    %8 = arith.truncf %7 : vector<16x32xf32> to vector<16x32xbf16>
    %c0_7 = arith.constant 0 : index
    %c0_8 = arith.constant 0 : index
    %9 = vector.load %arg6[%c0_7, %c0_8] : memref<32x32xbf16, #tpu.memory_space<vmem>>, vector<32x32xbf16>
    %cst_9 = arith.constant dense<0.000000e+00> : vector<16x32xf32>
    %10 = tpu.matmul %8, %9, %cst_9 {dimension_numbers = #tpu.dot_dimension_numbers<[1], [0], [0], [1], [0, 0, 1, 1], [], []>} : vector<16x32xbf16>, vector<32x32xbf16>, vector<16x32xf32> -> vector<16x32xf32>
    %c0_10 = arith.constant 0 : index
    %c0_11 = arith.constant 0 : index
    %11 = vector.load %arg7[%c0_10, %c0_11] : memref<1x32xf32, #tpu.memory_space<vmem>>, vector<1x32xf32>
    %12 = vector.broadcast %11 : vector<1x32xf32> to vector<16x32xf32>
    %13 = arith.addf %10, %12 : vector<16x32xf32>
    %c0_12 = arith.constant 0 : index
    %c0_13 = arith.constant 0 : index
    %14 = vector.load %arg3[%c0_12, %c0_13] : memref<16x32xf32, #tpu.memory_space<vmem>>, vector<16x32xf32>
    %15 = arith.truncf %14 : vector<16x32xf32> to vector<16x32xbf16>
    %c0_14 = arith.constant 0 : index
    %c0_15 = arith.constant 0 : index
    %16 = vector.load %arg8[%c0_14, %c0_15] : memref<32x32xbf16, #tpu.memory_space<vmem>>, vector<32x32xbf16>
    %cst_16 = arith.constant dense<0.000000e+00> : vector<16x32xf32>
    %17 = tpu.matmul %15, %16, %cst_16 {dimension_numbers = #tpu.dot_dimension_numbers<[1], [0], [0], [1], [0, 0, 1, 1], [], []>} : vector<16x32xbf16>, vector<32x32xbf16>, vector<16x32xf32> -> vector<16x32xf32>
    %c0_17 = arith.constant 0 : index
    %c0_18 = arith.constant 0 : index
    %18 = vector.load %arg9[%c0_17, %c0_18] : memref<1x32xf32, #tpu.memory_space<vmem>>, vector<1x32xf32>
    %19 = vector.broadcast %18 : vector<1x32xf32> to vector<16x32xf32>
    %20 = arith.addf %17, %19 : vector<16x32xf32>
    %21 = arith.maximumf %6, %13 : vector<16x32xf32>
    %22 = arith.maximumf %21, %20 : vector<16x32xf32>
    %23 = arith.subf %6, %22 : vector<16x32xf32>
    %24 = math.exp %23 : vector<16x32xf32>
    %25 = arith.subf %13, %22 : vector<16x32xf32>
    %26 = math.exp %25 : vector<16x32xf32>
    %27 = arith.subf %20, %22 : vector<16x32xf32>
    %28 = math.exp %27 : vector<16x32xf32>
    %29 = arith.mulf %24, %6 : vector<16x32xf32>
    %30 = arith.mulf %26, %13 : vector<16x32xf32>
    %31 = arith.addf %29, %30 : vector<16x32xf32>
    %32 = arith.mulf %28, %20 : vector<16x32xf32>
    %33 = arith.addf %31, %32 : vector<16x32xf32>
    %34 = arith.addf %24, %26 : vector<16x32xf32>
    %35 = arith.addf %34, %28 : vector<16x32xf32>
    %36 = tpu.reciprocal %35 {approx = true} : vector<16x32xf32> -> vector<16x32xf32>
    %37 = arith.mulf %33, %36 : vector<16x32xf32>
    %38 = arith.truncf %37 : vector<16x32xf32> to vector<16x32xbf16>
    %c0_19 = arith.constant 0 : index
    %c0_20 = arith.constant 0 : index
    %39 = vector.load %arg10[%c0_19, %c0_20] : memref<32x32xbf16, #tpu.memory_space<vmem>>, vector<32x32xbf16>
    %cst_21 = arith.constant dense<0.000000e+00> : vector<16x32xf32>
    %40 = tpu.matmul %38, %39, %cst_21 {dimension_numbers = #tpu.dot_dimension_numbers<[1], [0], [0], [1], [0, 0, 1, 1], [], []>} : vector<16x32xbf16>, vector<32x32xbf16>, vector<16x32xf32> -> vector<16x32xf32>
    %c0_22 = arith.constant 0 : index
    %c0_23 = arith.constant 0 : index
    %41 = vector.load %arg11[%c0_22, %c0_23] : memref<1x32xf32, #tpu.memory_space<vmem>>, vector<1x32xf32>
    %42 = vector.broadcast %41 : vector<1x32xf32> to vector<16x32xf32>
    %43 = arith.addf %40, %42 : vector<16x32xf32>
    %c0_24 = arith.constant 0 : index
    %c0_25 = arith.constant 0 : index
    %44 = vector.load %arg12[%c0_24, %c0_25] : memref<16x32xf32, #tpu.memory_space<vmem>>, vector<16x32xf32>
    tpu.vector_store %arg12[%c0_24, %c0_25], %43 {strides = array<i32>} : memref<16x32xf32, #tpu.memory_space<vmem>>, vector<16x32xf32>,
    return
  }
  func.func @transform_0(%arg0: i32) -> (i32, i32) {
    %c0_i32 = arith.constant 0 : i32
    %c0_i32_0 = arith.constant 0 : i32
    return %arg0, %c0_i32 : i32, i32
  }
  func.func @transform_1(%arg0: i32) -> (i32, i32) {
    %c0_i32 = arith.constant 0 : i32
    %c0_i32_0 = arith.constant 0 : i32
    return %arg0, %c0_i32 : i32, i32
  }
  func.func @transform_2(%arg0: i32) -> (i32, i32) {
    %c0_i32 = arith.constant 0 : i32
    %c0_i32_0 = arith.constant 0 : i32
    return %arg0, %c0_i32 : i32, i32
  }
  func.func @transform_3(%arg0: i32) -> (i32, i32) {
    %c0_i32 = arith.constant 0 : i32
    %c0_i32_0 = arith.constant 0 : i32
    %c0_i32_1 = arith.constant 0 : i32
    return %c0_i32, %c0_i32_0 : i32, i32
  }
  func.func @transform_4(%arg0: i32) -> (i32, i32) {
    %c0_i32 = arith.constant 0 : i32
    %c0_i32_0 = arith.constant 0 : i32
    %c0_i32_1 = arith.constant 0 : i32
    return %c0_i32, %c0_i32_0 : i32, i32
  }
  func.func @transform_5(%arg0: i32) -> (i32, i32) {
    %c0_i32 = arith.constant 0 : i32
    %c0_i32_0 = arith.constant 0 : i32
    %c0_i32_1 = arith.constant 0 : i32
    return %c0_i32, %c0_i32_0 : i32, i32
  }
  func.func @transform_6(%arg0: i32) -> (i32, i32) {
    %c0_i32 = arith.constant 0 : i32
    %c0_i32_0 = arith.constant 0 : i32
    %c0_i32_1 = arith.constant 0 : i32
    return %c0_i32, %c0_i32_0 : i32, i32
  }
  func.func @transform_7(%arg0: i32) -> (i32, i32) {
    %c0_i32 = arith.constant 0 : i32
    %c0_i32_0 = arith.constant 0 : i32
    %c0_i32_1 = arith.constant 0 : i32
    return %c0_i32, %c0_i32_0 : i32, i32
  }
  func.func @transform_8(%arg0: i32) -> (i32, i32) {
    %c0_i32 = arith.constant 0 : i32
    %c0_i32_0 = arith.constant 0 : i32
    %c0_i32_1 = arith.constant 0 : i32
    return %c0_i32, %c0_i32_0 : i32, i32
  }
  func.func @transform_9(%arg0: i32) -> (i32, i32) {
    %c0_i32 = arith.constant 0 : i32
    %c0_i32_0 = arith.constant 0 : i32
    %c0_i32_1 = arith.constant 0 : i32
    return %c0_i32, %c0_i32_0 : i32, i32
  }
  func.func @transform_10(%arg0: i32) -> (i32, i32) {
    %c0_i32 = arith.constant 0 : i32
    %c0_i32_0 = arith.constant 0 : i32
    %c0_i32_1 = arith.constant 0 : i32
    return %c0_i32, %c0_i32_0 : i32, i32
  }
  func.func @transform_11(%arg0: i32) -> (i32, i32) {
    %c0_i32 = arith.constant 0 : i32
    %c0_i32_0 = arith.constant 0 : i32
    return %arg0, %c0_i32 : i32, i32
  }
}

</mosaic_0001>

<llo_original>
// kernel: tpu_custom_call.1
$region0: #{tpu_custom_call.1}
  #allocation0 [shape = 'u32[]', space=smem, size = 0x4, offset = 0x4, fixed_abs, tag = 'smem constant byte address 0x4 - core index']
  #allocation1 [shape = 'u32[144,128]{1,0:T(1,128)}', space=vmem, size = 0x12000, scoped, tag = 'internal scratch']
  %s0 = inlined_call_operand.hbm [shape: f32[16,32], index: 0, kind: input, shape index: {}]
  %s1 = inlined_call_operand.hbm [shape: f32[16,32], index: 1, kind: input, shape index: {}]
  %s2 = inlined_call_operand.hbm [shape: f32[16,32], index: 2, kind: input, shape index: {}]
  %s3 = inlined_call_operand.hbm [shape: bf16[32,32], index: 3, kind: input, shape index: {}]
  %s4 = inlined_call_operand.vmem [shape: f32[1,32], index: 4, kind: input, shape index: {}]
  %s5 = inlined_call_operand.vmem [shape: bf16[32,32], index: 5, kind: input, shape index: {}]
  %s6 = inlined_call_operand.vmem [shape: f32[1,32], index: 6, kind: input, shape index: {}]
  %s7 = inlined_call_operand.hbm [shape: bf16[32,32], index: 7, kind: input, shape index: {}]
  %s8 = inlined_call_operand.hbm [shape: f32[1,32], index: 8, kind: input, shape index: {}]
  %s9 = inlined_call_operand.vmem [shape: bf16[32,32], index: 9, kind: input, shape index: {}]
  %s10 = inlined_call_operand.vmem [shape: f32[1,32], index: 10, kind: input, shape index: {}]
  %s11 = inlined_call_operand.hbm [shape: f32[16,32], index: 11, kind: output, shape index: {}]
  %s12 = sld [smem:[#allocation0]]
  $region78: #{tpu_custom_call.1} parent=0
    _
  %s14 = ssub.s32 1, %s12
  %s15 = scalar_select 0, %s14, %s12
  $region1: #{tpu_custom_call.1} parent=0
    #allocation2 [shape = 'u8[8192]{0}', space=vmem, size = 0x2000, scoped, tag = 'input window, operand 0, single buffered']
    #allocation3 [shape = 's32[1]{0}', space=sflag, size = 0x4, scoped, tag = 'scoped memory for tpu_custom_call.1']
    #allocation4 [shape = 's32[1]{0}', space=sflag, size = 0x4, scoped, tag = 'scoped memory for tpu_custom_call.1']
    #allocation5 [shape = 'u8[8192]{0}', space=vmem, size = 0x2000, scoped, tag = 'input window, operand 1, single buffered']
    #allocation6 [shape = 's32[1]{0}', space=sflag, size = 0x4, scoped, tag = 'scoped memory for tpu_custom_call.1']
    #allocation7 [shape = 'u8[8192]{0}', space=vmem, size = 0x2000, scoped, tag = 'input window, operand 2, single buffered']
    #allocation8 [shape = 'u8[8192]{0}', space=vmem, size = 0x2000, scoped, tag = 'input window, operand 3, single buffered']
    #allocation9 [shape = 's32[1]{0}', space=sflag, size = 0x4, scoped, tag = 'scoped memory for tpu_custom_call.1']
    #allocation10 [shape = 'u8[8192]{0}', space=vmem, size = 0x2000, scoped, tag = 'input window, operand 7, single buffered']
    #allocation11 [shape = 'u8[512]{0}', space=vmem, size = 0x400, scoped, tag = 'input window, operand 8, single buffered']
    #allocation12 [shape = 's32[1]{0}', space=sflag, size = 0x4, scoped, tag = 'scoped memory for tpu_custom_call.1']
    #allocation13 [shape = 'u8[8192]{0}', space=vmem, size = 0x2000, scoped, tag = 'output window, operand 0, single buffered']
    %16 = vsyncpa [#allocation3], 0
    %17 = vsyncpa [#allocation6], 0
    %18 = vsyncpa [#allocation9], 0
    %19 = vsyncpa [#allocation12], 0
    %20 = vsyncpa [#allocation4], 0
    // Predicated region
    $region2: #{tpu_custom_call.1} parent=1 // pred_check
      _
    $region3: #{tpu_custom_call.1} parent=1 // pred_check_branch
      %22 = sbr.rel (0) target = $region5
    $region4: #{tpu_custom_call.1} parent=1 // pred_region
      %s24 = ssub.s32 256, 256
      %25 = vsyncadd [#allocation3], %s24
      %s26 = sshll.u32 [#allocation2], 4
      %s27 = int_to_ptr.vmem [resolvable:$true] %s26
      %32 = dma.hbm_to_vmem [thread:$0]  %s0, 256, %s27, [#allocation3], 128, 128, 8
    $region5: #{tpu_custom_call.1} parent=1 // pred_fallthru
      _
    // Predicated region
    $region6: #{tpu_custom_call.1} parent=1 // pred_check
      _
    $region7: #{tpu_custom_call.1} parent=1 // pred_check_branch
      %34 = sbr.rel (0) target = $region9
    $region8: #{tpu_custom_call.1} parent=1 // pred_region
      %s36 = ssub.s32 256, 256
      %37 = vsyncadd [#allocation6], %s36
      %s38 = sshll.u32 [#allocation5], 4
      %s39 = int_to_ptr.vmem [resolvable:$true] %s38
      %44 = dma.hbm_to_vmem [thread:$0]  %s1, 256, %s39, [#allocation6], 128, 128, 8
    $region9: #{tpu_custom_call.1} parent=1 // pred_fallthru
      _
    // Predicated region
    $region10: #{tpu_custom_call.1} parent=1 // pred_check
      _
    $region11: #{tpu_custom_call.1} parent=1 // pred_check_branch
      %46 = sbr.rel (0) target = $region13
    $region12: #{tpu_custom_call.1} parent=1 // pred_region
      %s48 = ssub.s32 256, 256
      %49 = vsyncadd [#allocation6], %s48
      %s50 = sshll.u32 [#allocation7], 4
      %s51 = int_to_ptr.vmem [resolvable:$true] %s50
      %56 = dma.hbm_to_vmem [thread:$0]  %s2, 256, %s51, [#allocation6], 128, 128, 8
    $region13: #{tpu_custom_call.1} parent=1 // pred_fallthru
      _
    // Predicated region
    $region14: #{tpu_custom_call.1} parent=1 // pred_check
      _
    $region15: #{tpu_custom_call.1} parent=1 // pred_check_branch
      %58 = sbr.rel (0) target = $region17
    $region16: #{tpu_custom_call.1} parent=1 // pred_region
      %s60 = ssub.s32 256, 256
      %61 = vsyncadd [#allocation9], %s60
      %s62 = sshll.u32 [#allocation8], 4
      %s63 = int_to_ptr.vmem [resolvable:$true] %s62
      %68 = dma.hbm_to_vmem [thread:$0]  %s3, 256, %s63, [#allocation9], 64, 64, 4
    $region17: #{tpu_custom_call.1} parent=1 // pred_fallthru
      _
    // Predicated region
    $region18: #{tpu_custom_call.1} parent=1 // pred_check
      _
    $region19: #{tpu_custom_call.1} parent=1 // pred_check_branch
      %70 = sbr.rel (0) target = $region21
    $region20: #{tpu_custom_call.1} parent=1 // pred_region
      _
    $region21: #{tpu_custom_call.1} parent=1 // pred_fallthru
      _
    // Predicated region
    $region22: #{tpu_custom_call.1} parent=1 // pred_check
      _
    $region23: #{tpu_custom_call.1} parent=1 // pred_check_branch
      %72 = sbr.rel (0) target = $region25
    $region24: #{tpu_custom_call.1} parent=1 // pred_region
      _
    $region25: #{tpu_custom_call.1} parent=1 // pred_fallthru
      _
    // Predicated region
    $region26: #{tpu_custom_call.1} parent=1 // pred_check
      _
    $region27: #{tpu_custom_call.1} parent=1 // pred_check_branch
      %74 = sbr.rel (0) target = $region29
    $region28: #{tpu_custom_call.1} parent=1 // pred_region
      _
    $region29: #{tpu_custom_call.1} parent=1 // pred_fallthru
      _
    // Predicated region
    $region30: #{tpu_custom_call.1} parent=1 // pred_check
      _
    $region31: #{tpu_custom_call.1} parent=1 // pred_check_branch
      %76 = sbr.rel (0) target = $region33
    $region32: #{tpu_custom_call.1} parent=1 // pred_region
      %s78 = ssub.s32 256, 256
      %79 = vsyncadd [#allocation9], %s78
      %s80 = sshll.u32 [#allocation10], 4
      %s81 = int_to_ptr.vmem [resolvable:$true] %s80
      %86 = dma.hbm_to_vmem [thread:$0]  %s7, 256, %s81, [#allocation9], 64, 64, 4
    $region33: #{tpu_custom_call.1} parent=1 // pred_fallthru
      _
    // Predicated region
    $region34: #{tpu_custom_call.1} parent=1 // pred_check
      _
    $region35: #{tpu_custom_call.1} parent=1 // pred_check_branch
      %88 = sbr.rel (0) target = $region37
    $region36: #{tpu_custom_call.1} parent=1 // pred_region
      %s90 = ssub.s32 16, 16
      %91 = vsyncadd [#allocation12], %s90
      %s93 = sshll.u32 [#allocation11], 4
      %s94 = int_to_ptr.vmem [resolvable:$true] %s93
      %96 = dma.hbm_to_vmem [thread:$0]  %s8, 16, %s94, [#allocation12]
    $region37: #{tpu_custom_call.1} parent=1 // pred_fallthru
      _
    // Predicated region
    $region38: #{tpu_custom_call.1} parent=1 // pred_check
      _
    $region39: #{tpu_custom_call.1} parent=1 // pred_check_branch
      %98 = sbr.rel (0) target = $region41
    $region40: #{tpu_custom_call.1} parent=1 // pred_region
      _
    $region41: #{tpu_custom_call.1} parent=1 // pred_fallthru
      _
    // Predicated region
    $region42: #{tpu_custom_call.1} parent=1 // pred_check
      _
    $region43: #{tpu_custom_call.1} parent=1 // pred_check_branch
      %100 = sbr.rel (0) target = $region45
    $region44: #{tpu_custom_call.1} parent=1 // pred_region
      _
    $region45: #{tpu_custom_call.1} parent=1 // pred_fallthru
      _
    // Predicated region
    $region46: #{tpu_custom_call.1} parent=1 // pred_check
      _
    $region47: #{tpu_custom_call.1} parent=1 // pred_check_branch
      %102 = sbr.rel (0) target = $region49
    $region48: #{tpu_custom_call.1} parent=1 // pred_region
      %103 = dma.done [#allocation3], 256
    $region49: #{tpu_custom_call.1} parent=1 // pred_fallthru
      _
    // Predicated region
    $region50: #{tpu_custom_call.1} parent=1 // pred_check
      _
    $region51: #{tpu_custom_call.1} parent=1 // pred_check_branch
      %105 = sbr.rel (0) target = $region53
    $region52: #{tpu_custom_call.1} parent=1 // pred_region
      %106 = dma.done [#allocation6], 256
    $region53: #{tpu_custom_call.1} parent=1 // pred_fallthru
      _
    // Predicated region
    $region54: #{tpu_custom_call.1} parent=1 // pred_check
      _
    $region55: #{tpu_custom_call.1} parent=1 // pred_check_branch
      %108 = sbr.rel (0) target = $region57
    $region56: #{tpu_custom_call.1} parent=1 // pred_region
      %109 = dma.done [#allocation6], 256
    $region57: #{tpu_custom_call.1} parent=1 // pred_fallthru
      _
    // Predicated region
    $region58: #{tpu_custom_call.1} parent=1 // pred_check
      _
    $region59: #{tpu_custom_call.1} parent=1 // pred_check_branch
      %111 = sbr.rel (0) target = $region61
    $region60: #{tpu_custom_call.1} parent=1 // pred_region
      %112 = dma.done [#allocation9], 256
    $region61: #{tpu_custom_call.1} parent=1 // pred_fallthru
      _
    // Predicated region
    $region62: #{tpu_custom_call.1} parent=1 // pred_check
      _
    $region63: #{tpu_custom_call.1} parent=1 // pred_check_branch
      %114 = sbr.rel (0) target = $region65
    $region64: #{tpu_custom_call.1} parent=1 // pred_region
      %115 = dma.done [#allocation9], 256
    $region65: #{tpu_custom_call.1} parent=1 // pred_fallthru
      _
    // Predicated region
    $region66: #{tpu_custom_call.1} parent=1 // pred_check
      _
    $region67: #{tpu_custom_call.1} parent=1 // pred_check_branch
      %117 = sbr.rel (0) target = $region69
    $region68: #{tpu_custom_call.1} parent=1 // pred_region
      %118 = dma.done [#allocation12], 16
    $region69: #{tpu_custom_call.1} parent=1 // pred_fallthru
      _
    %v120 = vld [vmem:[#allocation2] sm:$0xff]
    %v121 = vld [vmem:[#allocation2 + $0x8] sm:$0xff]
    %v122 = vpack.c.bf16 %v121, %v120
    %v123 = vld [vmem:[#allocation8] sm:$0xf]
    %v124 = vld [vmem:[#allocation8 + $0x4] sm:$0xf]
    %v125 = vld [vmem:[#allocation8 + $0x8] sm:$0xf]
    %v126 = vld [vmem:[#allocation8 + $0xc] sm:$0xf]
    %v127 = vld [vmem:[%s4] sm:$0x1]
    %v129 = vlaneseq
    %v130 = vshrl.u32 %v129, 7
    %v131 = vsub.s32 0, %v130
    %v132 = vrot.slane %v127, %v131
    %v138 = vunpack.c.l.b16 %v123
    %v139 = vunpack.c.l.b16 %v124
    %v140 = vunpack.c.l.b16 %v125
    %v141 = vunpack.c.l.b16 %v126
    %v142 = vpack.c.b16 %v139, %v138
    %v143 = vpack.c.b16 %v141, %v140
    %vm146 = vcmask 261120
    %v148 = vsel %vm146, %v122, 0
    %150 = vmatprep.subr.bf16.mxu0 0
    %151 = vmatpush1.bf16.msra.mxu0 %v142
    %152 = vmatprep.subr.bf16.mxu0 0
    %153 = vmatpush1.bf16.msra.mxu0 %v143
    %154 = vmatprep.subr.bf16.mxu0 0
    %155 = vmatpush1.bf16.msra.mxu0 0
    %156 = vmatprep.subr.bf16.mxu0 0
    %157 = vmatpush1.bf16.msra.mxu0 0
    %158 = vmatprep.subr.bf16.mxu0 0
    %159 = vmatpush1.bf16.msra.mxu0 0
    %160 = vmatprep.subr.bf16.mxu0 0
    %161 = vmatpush1.bf16.msra.mxu0 0
    %162 = vmatprep.subr.bf16.mxu0 0
    %163 = vmatpush1.bf16.msra.mxu0 0
    %164 = vmatprep.subr.bf16.mxu0 0
    %165 = vmatpush1.bf16.msra.mxu0 0
    %166 = vmatprep.subr.bf16.mxu0 0
    %167 = vmatpush1.bf16.msra.mxu0 0
    %168 = vmatprep.subr.bf16.mxu0 0
    %169 = vmatpush1.bf16.msra.mxu0 0
    %170 = vmatprep.subr.bf16.mxu0 0
    %171 = vmatpush1.bf16.msra.mxu0 0
    %172 = vmatprep.subr.bf16.mxu0 0
    %173 = vmatpush1.bf16.msra.mxu0 0
    %174 = vmatprep.subr.bf16.mxu0 0
    %175 = vmatpush1.bf16.msra.mxu0 0
    %176 = vmatprep.subr.bf16.mxu0 0
    %177 = vmatpush1.bf16.msra.mxu0 0
    %178 = vmatprep.subr.bf16.mxu0 0
    %179 = vmatpush1.bf16.msra.mxu0 0
    %180 = vmatprep.subr.bf16.mxu0 0
    %181 = vmatpush1.bf16.msra.mxu0 0
    %182 = vmatprep.mubr.bf16.mxu0 0
    %183 = vmatmul.mubr.bf16.gmra.mrb[0].mxu0 %v148
    %v184 = vpop.f32.mrb[0].mxu0
    %v185 = vadd.f32 %v132, %v184
    %v186 = vpop.f32.mrb[0].mxu0
    %v187 = vpop.f32.mrb[0].mxu0
    %v188 = vadd.f32 %v132, %v187
    %v189 = vpop.f32.mrb[0].mxu0
    %190 = vdwg.mxu0
    %v191 = vld [vmem:[#allocation5] sm:$0xff]
    %v192 = vld [vmem:[#allocation5 + $0x8] sm:$0xff]
    %v193 = vpack.c.bf16 %v192, %v191
    %v194 = vld [vmem:[%s5] sm:$0xf]
    %v195 = vld [vmem:[%s5 + $0x4] sm:$0xf]
    %v196 = vld [vmem:[%s5 + $0x8] sm:$0xf]
    %v197 = vld [vmem:[%s5 + $0xc] sm:$0xf]
    %v198 = vld [vmem:[%s6] sm:$0x1]
    %v200 = vlaneseq
    %v201 = vshrl.u32 %v200, 7
    %v202 = vsub.s32 0, %v201
    %v203 = vrot.slane %v198, %v202
    %v209 = vunpack.c.l.b16 %v194
    %v210 = vunpack.c.l.b16 %v195
    %v211 = vunpack.c.l.b16 %v196
    %v212 = vunpack.c.l.b16 %v197
    %v213 = vpack.c.b16 %v210, %v209
    %v214 = vpack.c.b16 %v212, %v211
    %v218 = vsel %vm146, %v193, 0
    %220 = vmatprep.subr.bf16.mxu0 0
    %221 = vmatpush1.bf16.msra.mxu0 %v213
    %222 = vmatprep.subr.bf16.mxu0 0
    %223 = vmatpush1.bf16.msra.mxu0 %v214
    %224 = vmatprep.subr.bf16.mxu0 0
    %225 = vmatpush1.bf16.msra.mxu0 0
    %226 = vmatprep.subr.bf16.mxu0 0
    %227 = vmatpush1.bf16.msra.mxu0 0
    %228 = vmatprep.subr.bf16.mxu0 0
    %229 = vmatpush1.bf16.msra.mxu0 0
    %230 = vmatprep.subr.bf16.mxu0 0
    %231 = vmatpush1.bf16.msra.mxu0 0
    %232 = vmatprep.subr.bf16.mxu0 0
    %233 = vmatpush1.bf16.msra.mxu0 0
    %234 = vmatprep.subr.bf16.mxu0 0
    %235 = vmatpush1.bf16.msra.mxu0 0
    %236 = vmatprep.subr.bf16.mxu0 0
    %237 = vmatpush1.bf16.msra.mxu0 0
    %238 = vmatprep.subr.bf16.mxu0 0
    %239 = vmatpush1.bf16.msra.mxu0 0
    %240 = vmatprep.subr.bf16.mxu0 0
    %241 = vmatpush1.bf16.msra.mxu0 0
    %242 = vmatprep.subr.bf16.mxu0 0
    %243 = vmatpush1.bf16.msra.mxu0 0
    %244 = vmatprep.subr.bf16.mxu0 0
    %245 = vmatpush1.bf16.msra.mxu0 0
    %246 = vmatprep.subr.bf16.mxu0 0
    %247 = vmatpush1.bf16.msra.mxu0 0
    %248 = vmatprep.subr.bf16.mxu0 0
    %249 = vmatpush1.bf16.msra.mxu0 0
    %250 = vmatprep.subr.bf16.mxu0 0
    %251 = vmatpush1.bf16.msra.mxu0 0
    %252 = vmatprep.mubr.bf16.mxu0 0
    %253 = vmatmul.mubr.bf16.gmra.mrb[0].mxu0 %v218
    %v254 = vpop.f32.mrb[0].mxu0
    %v255 = vadd.f32 %v203, %v254
    %v256 = vpop.f32.mrb[0].mxu0
    %v257 = vpop.f32.mrb[0].mxu0
    %v258 = vadd.f32 %v203, %v257
    %v259 = vpop.f32.mrb[0].mxu0
    %260 = vdwg.mxu0
    %v261 = vld [vmem:[#allocation7] sm:$0xff]
    %v262 = vld [vmem:[#allocation7 + $0x8] sm:$0xff]
    %v263 = vpack.c.bf16 %v262, %v261
    %v264 = vld [vmem:[#allocation10] sm:$0xf]
    %v265 = vld [vmem:[#allocation10 + $0x4] sm:$0xf]
    %v266 = vld [vmem:[#allocation10 + $0x8] sm:$0xf]
    %v267 = vld [vmem:[#allocation10 + $0xc] sm:$0xf]
    %v268 = vld [vmem:[#allocation11] sm:$0x1]
    %v270 = vlaneseq
    %v271 = vshrl.u32 %v270, 7
    %v272 = vsub.s32 0, %v271
    %v273 = vrot.slane %v268, %v272
    %v279 = vunpack.c.l.b16 %v264
    %v280 = vunpack.c.l.b16 %v265
    %v281 = vunpack.c.l.b16 %v266
    %v282 = vunpack.c.l.b16 %v267
    %v283 = vpack.c.b16 %v280, %v279
    %v284 = vpack.c.b16 %v282, %v281
    %v288 = vsel %vm146, %v263, 0
    %290 = vmatprep.subr.bf16.mxu0 0
    %291 = vmatpush1.bf16.msra.mxu0 %v283
    %292 = vmatprep.subr.bf16.mxu0 0
    %293 = vmatpush1.bf16.msra.mxu0 %v284
    %294 = vmatprep.subr.bf16.mxu0 0
    %295 = vmatpush1.bf16.msra.mxu0 0
    %296 = vmatprep.subr.bf16.mxu0 0
    %297 = vmatpush1.bf16.msra.mxu0 0
    %298 = vmatprep.subr.bf16.mxu0 0
    %299 = vmatpush1.bf16.msra.mxu0 0
    %300 = vmatprep.subr.bf16.mxu0 0
    %301 = vmatpush1.bf16.msra.mxu0 0
    %302 = vmatprep.subr.bf16.mxu0 0
    %303 = vmatpush1.bf16.msra.mxu0 0
    %304 = vmatprep.subr.bf16.mxu0 0
    %305 = vmatpush1.bf16.msra.mxu0 0
    %306 = vmatprep.subr.bf16.mxu0 0
    %307 = vmatpush1.bf16.msra.mxu0 0
    %308 = vmatprep.subr.bf16.mxu0 0
    %309 = vmatpush1.bf16.msra.mxu0 0
    %310 = vmatprep.subr.bf16.mxu0 0
    %311 = vmatpush1.bf16.msra.mxu0 0
    %312 = vmatprep.subr.bf16.mxu0 0
    %313 = vmatpush1.bf16.msra.mxu0 0
    %314 = vmatprep.subr.bf16.mxu0 0
    %315 = vmatpush1.bf16.msra.mxu0 0
    %316 = vmatprep.subr.bf16.mxu0 0
    %317 = vmatpush1.bf16.msra.mxu0 0
    %318 = vmatprep.subr.bf16.mxu0 0
    %319 = vmatpush1.bf16.msra.mxu0 0
    %320 = vmatprep.subr.bf16.mxu0 0
    %321 = vmatpush1.bf16.msra.mxu0 0
    %322 = vmatprep.mubr.bf16.mxu0 0
    %323 = vmatmul.mubr.bf16.gmra.mrb[0].mxu0 %v288
    %v324 = vpop.f32.mrb[0].mxu0
    %v325 = vadd.f32 %v273, %v324
    %v326 = vpop.f32.mrb[0].mxu0
    %v327 = vpop.f32.mrb[0].mxu0
    %v328 = vadd.f32 %v273, %v327
    %v329 = vpop.f32.mrb[0].mxu0
    %330 = vdwg.mxu0
    %v331 = vmax.f32 %v185, %v255
    %v332 = vmax.f32 %v188, %v258
    %v333 = vmax.f32 %v331, %v325
    %v334 = vmax.f32 %v332, %v328
    %v335 = vsub.f32 %v185, %v333
    %v336 = vsub.f32 %v188, %v334
    %v337 = vmul.f32 %v335, 1.442695
    %v338 = vpow.pop %v337
    %v339 = vmul.f32 %v336, 1.442695
    %v340 = vpow.pop %v339
    %v341 = vsub.f32 %v255, %v333
    %v342 = vsub.f32 %v258, %v334
    %v343 = vmul.f32 %v341, 1.442695
    %v344 = vpow.pop %v343
    %v345 = vmul.f32 %v342, 1.442695
    %v346 = vpow.pop %v345
    %v347 = vsub.f32 %v325, %v333
    %v348 = vsub.f32 %v328, %v334
    %v349 = vmul.f32 %v347, 1.442695
    %v350 = vpow.pop %v349
    %v351 = vmul.f32 %v348, 1.442695
    %v352 = vpow.pop %v351
    %v353 = vmul.f32 %v338, %v185
    %v354 = vmul.f32 %v340, %v188
    %v355 = vmul.f32 %v344, %v255
    %v356 = vmul.f32 %v346, %v258
    %v357 = vadd.f32 %v353, %v355
    %v358 = vadd.f32 %v354, %v356
    %v359 = vmul.f32 %v350, %v325
    %v360 = vmul.f32 %v352, %v328
    %v361 = vadd.f32 %v357, %v359
    %v362 = vadd.f32 %v358, %v360
    %v363 = vadd.f32 %v338, %v344
    %v364 = vadd.f32 %v340, %v346
    %v365 = vadd.f32 %v363, %v350
    %v366 = vadd.f32 %v364, %v352
    %v367 = vrcp.pop %v365
    %v368 = vrcp.pop %v366
    %v369 = vmul.f32 %v361, %v367
    %v370 = vmul.f32 %v362, %v368
    %v371 = vpack.c.bf16 %v370, %v369
    %v372 = vld [vmem:[%s9] sm:$0xf]
    %v373 = vld [vmem:[%s9 + $0x4] sm:$0xf]
    %v374 = vld [vmem:[%s9 + $0x8] sm:$0xf]
    %v375 = vld [vmem:[%s9 + $0xc] sm:$0xf]
    %v376 = vld [vmem:[%s10] sm:$0x1]
    %v378 = vlaneseq
    %v379 = vshrl.u32 %v378, 7
    %v380 = vsub.s32 0, %v379
    %v381 = vrot.slane %v376, %v380
    %v387 = vunpack.c.l.b16 %v372
    %v388 = vunpack.c.l.b16 %v373
    %v389 = vunpack.c.l.b16 %v374
    %v390 = vunpack.c.l.b16 %v375
    %v391 = vpack.c.b16 %v388, %v387
    %v392 = vpack.c.b16 %v390, %v389
    %v396 = vsel %vm146, %v371, 0
    %398 = vmatprep.subr.bf16.mxu0 0
    %399 = vmatpush1.bf16.msra.mxu0 %v391
    %400 = vmatprep.subr.bf16.mxu0 0
    %401 = vmatpush1.bf16.msra.mxu0 %v392
    %402 = vmatprep.subr.bf16.mxu0 0
    %403 = vmatpush1.bf16.msra.mxu0 0
    %404 = vmatprep.subr.bf16.mxu0 0
    %405 = vmatpush1.bf16.msra.mxu0 0
    %406 = vmatprep.subr.bf16.mxu0 0
    %407 = vmatpush1.bf16.msra.mxu0 0
    %408 = vmatprep.subr.bf16.mxu0 0
    %409 = vmatpush1.bf16.msra.mxu0 0
    %410 = vmatprep.subr.bf16.mxu0 0
    %411 = vmatpush1.bf16.msra.mxu0 0
    %412 = vmatprep.subr.bf16.mxu0 0
    %413 = vmatpush1.bf16.msra.mxu0 0
    %414 = vmatprep.subr.bf16.mxu0 0
    %415 = vmatpush1.bf16.msra.mxu0 0
    %416 = vmatprep.subr.bf16.mxu0 0
    %417 = vmatpush1.bf16.msra.mxu0 0
    %418 = vmatprep.subr.bf16.mxu0 0
    %419 = vmatpush1.bf16.msra.mxu0 0
    %420 = vmatprep.subr.bf16.mxu0 0
    %421 = vmatpush1.bf16.msra.mxu0 0
    %422 = vmatprep.subr.bf16.mxu0 0
    %423 = vmatpush1.bf16.msra.mxu0 0
    %424 = vmatprep.subr.bf16.mxu0 0
    %425 = vmatpush1.bf16.msra.mxu0 0
    %426 = vmatprep.subr.bf16.mxu0 0
    %427 = vmatpush1.bf16.msra.mxu0 0
    %428 = vmatprep.subr.bf16.mxu0 0
    %429 = vmatpush1.bf16.msra.mxu0 0
    %430 = vmatprep.mubr.bf16.mxu0 0
    %431 = vmatmul.mubr.bf16.gmra.mrb[0].mxu0 %v396
    %v432 = vpop.f32.mrb[0].mxu0
    %v433 = vadd.f32 %v381, %v432
    %v434 = vpop.f32.mrb[0].mxu0
    %v435 = vpop.f32.mrb[0].mxu0
    %v436 = vadd.f32 %v381, %v435
    %v437 = vpop.f32.mrb[0].mxu0
    %438 = vdwg.mxu0
    %439 = vst.msk [vmem:[#allocation13] sm:$0xff] %vm146, %v433
    %440 = vst.msk [vmem:[#allocation13 + $0x8] sm:$0xff] %vm146, %v436
    // Predicated region
    $region70: #{tpu_custom_call.1} parent=1 // pred_check
      _
    $region71: #{tpu_custom_call.1} parent=1 // pred_check_branch
      %442 = sbr.rel (0) target = $region73
    $region72: #{tpu_custom_call.1} parent=1 // pred_region
      %s444 = ssub.s32 256, 256
      %445 = vsyncadd [#allocation4], %s444
      %s446 = sshll.u32 [#allocation13], 4
      %s447 = int_to_ptr.vmem [resolvable:$true] %s446
      %452 = dma.vmem_to_hbm [thread:$0]  %s447, 256, %s11, [#allocation4], 128, 128, 8
    $region73: #{tpu_custom_call.1} parent=1 // pred_fallthru
      _
    // Predicated region
    $region74: #{tpu_custom_call.1} parent=1 // pred_check
      _
    $region75: #{tpu_custom_call.1} parent=1 // pred_check_branch
      %454 = sbr.rel (0) target = $region77
    $region76: #{tpu_custom_call.1} parent=1 // pred_region
      %455 = dma.done [#allocation4], 256
    $region77: #{tpu_custom_call.1} parent=1 // pred_fallthru
      _
    %456 = vsyncpa [#allocation3], 1
    %457 = vsyncpa [#allocation6], 1
    %458 = vsyncpa [#allocation9], 1
    %459 = vsyncpa [#allocation12], 1
    %460 = vsyncpa [#allocation4], 1

</llo_original>
